<compile_context>
chip_gen: v5e
topology: v5e:2x2
jax: 0.10.0
libtpu: 0.0.40
codegen_flags: <defaults>
</compile_context>

<pallas_src>
import functools

import jax
import jax.numpy as jnp
from jax.experimental import pallas as pl
from jax.experimental.pallas import tpu as pltpu


# Scoped-VMEM cap: 64 MiB is safe on every generation (v7x has 64 MiB per TC);
# on v5e/v6e (128 MiB physical) raise to ~96 MiB to enable tm=512.
_VMEM_LIMIT_BYTES = 64 * 1024 * 1024


def _round_up(x, m):
    return (x + m - 1) // m * m


def _token_tiling(m, tm):
    tm = min(tm, _round_up(m, 8))          # keep (8,128)-aligned tiles
    m_pad = _round_up(m, tm)
    return tm, m_pad


# ---------------------------------------------------------------------------
# Kernels
# ---------------------------------------------------------------------------
def _dense_bias_kernel(scale_ref, x_ref, w_ref, b_ref, out_ref, *, quantize, qmax):
    """QLinear forward (eval): out = fake_quant(x) @ w + b."""
    x = x_ref[...]
    if quantize:
        # Fused activation fake-quant: per-tensor scale lives in SMEM, so the
        # activation is only streamed from HBM once (no wrapper-side quant pass).
        s = scale_ref[0]
        x = (jnp.clip(jnp.round(x.astype(jnp.float32) / s), -qmax, qmax) * s
             ).astype(x_ref.dtype)
    # Native-dtype operands on the MXU, f32 accumulation.
    h = jnp.dot(x, w_ref[...], preferred_element_type=jnp.float32)
    out_ref[...] = (h + b_ref[...]).astype(out_ref.dtype)


def _attention_kernel(q_ref, k_ref, v_ref, o_ref, *, sm_scale):
    """One (batch, head): softmax(q k^T * scale) @ v on a single (S, dh) head."""
    q = q_ref[0]                                      # (S, dh)
    k = k_ref[0]
    v = v_ref[0]
    s = jnp.dot(q, k.T, preferred_element_type=jnp.float32) * sm_scale
    m = jnp.max(s, axis=-1, keepdims=True)
    p = jnp.exp(s - m)
    p = p / jnp.sum(p, axis=-1, keepdims=True)
    # TODO(synk): attention-prob dropout / attention_mask / head_mask not implemented
    # (eval mode, default-None arguments of the PyTorch forward).
    # TODO(synk): for long sequences this should be a flash-style kernel tiled over S.
    o = jnp.dot(p.astype(v.dtype), v, preferred_element_type=jnp.float32)
    o_ref[0] = o.astype(o_ref.dtype)


def _self_output_kernel(scale_ref, x_ref, w_ref, b_ref, res_ref, gamma_ref,
                        beta_ref, out_ref, *, eps, quantize, qmax):
    """QBertSelfOutput: LayerNorm(fake_quant(x) @ w + b + residual)."""
    x = x_ref[...]
    if quantize:
        s = scale_ref[0]
        x = (jnp.clip(jnp.round(x.astype(jnp.float32) / s), -qmax, qmax) * s
             ).astype(x_ref.dtype)
    h = jnp.dot(x, w_ref[...], preferred_element_type=jnp.float32)
    h = h + b_ref[...]                                # bias is already f32 (1, N)
    # TODO(synk): hidden dropout is eval-mode identity (deterministic).
    h = h + res_ref[...].astype(jnp.float32)          # residual add
    mean = jnp.mean(h, axis=-1, keepdims=True)
    c = h - mean
    var = jnp.mean(c * c, axis=-1, keepdims=True)
    out = c * jax.lax.rsqrt(var + eps) * gamma_ref[...] + beta_ref[...]
    out_ref[...] = out.astype(out_ref.dtype)


# ---------------------------------------------------------------------------
# pallas_call wrappers
# ---------------------------------------------------------------------------
def _dense_bias(x, w, b_f32, scale, *, quantize, qmax, tm):
    m, k = x.shape
    n = w.shape[1]
    tm, m_pad = _token_tiling(m, tm)
    if m_pad != m:
        x = jnp.pad(x, ((0, m_pad - m), (0, 0)))      # pad tail tile, slice later
    kernel = functools.partial(_dense_bias_kernel, quantize=quantize, qmax=qmax)
    out = pl.pallas_call(
        kernel,
        out_shape=jax.ShapeDtypeStruct((m_pad, n), x.dtype),
        grid_spec=pltpu.PrefetchScalarGridSpec(
            num_scalar_prefetch=0,
            grid=(m_pad // tm,),
            in_specs=[
                pl.BlockSpec(memory_space=pltpu.MemorySpace.SMEM),  # scale (1,) f32
                pl.BlockSpec((tm, k), lambda i: (i, 0)),            # activation tile
                pl.BlockSpec((k, n), lambda i: (0, 0)),             # weight (resident)
                pl.BlockSpec((1, n), lambda i: (0, 0)),             # bias (f32)
            ],
            out_specs=pl.BlockSpec((tm, n), lambda i: (i, 0)),
        ),
        compiler_params=pltpu.CompilerParams(
            dimension_semantics=("parallel",),
            vmem_limit_bytes=_VMEM_LIMIT_BYTES),
    )(scale, x, w, b_f32)
    return out[:m] if m_pad != m else out


def _attention(q, k, v, *, sm_scale):
    # q/k/v: (B*nH, S, dh) — one grid step per (batch, head) pair.
    bh, s, dh = q.shape
    kernel = functools.partial(_attention_kernel, sm_scale=sm_scale)
    return pl.pallas_call(
        kernel,
        out_shape=jax.ShapeDtypeStruct((bh, s, dh), q.dtype),
        grid_spec=pltpu.PrefetchScalarGridSpec(
            num_scalar_prefetch=0,
            grid=(bh,),
            in_specs=[
                pl.BlockSpec((1, s, dh), lambda i: (i, 0, 0)),
                pl.BlockSpec((1, s, dh), lambda i: (i, 0, 0)),
                pl.BlockSpec((1, s, dh), lambda i: (i, 0, 0)),
            ],
            out_specs=pl.BlockSpec((1, s, dh), lambda i: (i, 0, 0)),
        ),
        compiler_params=pltpu.CompilerParams(
            dimension_semantics=("parallel",),
            vmem_limit_bytes=_VMEM_LIMIT_BYTES),
    )(q, k, v)


def _self_output(x, w, b_f32, res, gamma_f32, beta_f32, scale, *, quantize, qmax,
                 eps, tm):
    m, k = x.shape
    n = w.shape[1]
    tm, m_pad = _token_tiling(m, tm)
    if m_pad != m:
        pad = ((0, m_pad - m), (0, 0))
        x = jnp.pad(x, pad)
        res = jnp.pad(res, pad)
    kernel = functools.partial(_self_output_kernel, eps=eps, quantize=quantize,
                               qmax=qmax)
    out = pl.pallas_call(
        kernel,
        out_shape=jax.ShapeDtypeStruct((m_pad, n), x.dtype),
        grid_spec=pltpu.PrefetchScalarGridSpec(
            num_scalar_prefetch=0,
            grid=(m_pad // tm,),
            in_specs=[
                pl.BlockSpec(memory_space=pltpu.MemorySpace.SMEM),  # scale (1,) f32
                pl.BlockSpec((tm, k), lambda i: (i, 0)),            # activation tile
                pl.BlockSpec((k, n), lambda i: (0, 0)),             # weight (resident)
                pl.BlockSpec((1, n), lambda i: (0, 0)),             # bias (f32)
                pl.BlockSpec((tm, n), lambda i: (i, 0)),            # residual tile
                pl.BlockSpec((1, n), lambda i: (0, 0)),             # gamma (f32)
                pl.BlockSpec((1, n), lambda i: (0, 0)),             # beta (f32)
            ],
            out_specs=pl.BlockSpec((tm, n), lambda i: (i, 0)),
        ),
        compiler_params=pltpu.CompilerParams(
            dimension_semantics=("parallel",),
            vmem_limit_bytes=_VMEM_LIMIT_BYTES),
    )(scale, x, w, b_f32, res, gamma_f32, beta_f32)
    return out[:m] if m_pad != m else out


# ---------------------------------------------------------------------------
# Module-level wrapper
# ---------------------------------------------------------------------------
def _fake_quantize(t, num_bits):
    # TODO(synk): stand-in symmetric per-tensor fake quant; the exact CPT
    # cyclic-precision QLinear quantizer is not reproduced here.
    qmax = 2.0 ** (num_bits - 1) - 1.0
    scale = jnp.max(jnp.abs(t)) / qmax + 1e-12
    return jnp.clip(jnp.round(t / scale), -qmax, qmax) * scale


def qbert_attention(hidden_states, params, num_bits=0, num_grad_bits=0, *,
                    num_heads, eps=1e-12, tm=256):
    """QBertAttention forward (eval).  hidden_states: [B, S, hidden]."""
    del num_grad_bits  # only affects the backward pass of the original module
    B, S, H = hidden_states.shape
    assert H % num_heads == 0
    dh = H // num_heads
    M = B * S
    x2d = hidden_states.reshape(M, H)

    quantize = bool(num_bits) and num_bits < 32
    qmax = float(2 ** (num_bits - 1) - 1) if quantize else 1.0

    w_qkv = params["w_qkv"]                      # [H, 3H] (transposed vs. PyTorch)
    w_out = params["w_out"]                      # [H, H]
    b_qkv = params["b_qkv"].astype(jnp.float32)  # (1, 3H)
    b_out = params["b_out"].astype(jnp.float32)  # (1, H)
    gamma = params["gamma"].astype(jnp.float32)  # (1, H)
    beta = params["beta"].astype(jnp.float32)    # (1, H)

    if quantize:
        # Weights are fake-quantized once per call (cache in the caller for reuse);
        # activations are quantized inside the kernels via an SMEM scale.
        w_qkv = _fake_quantize(w_qkv, num_bits)
        w_out = _fake_quantize(w_out, num_bits)
        x_scale = jnp.reshape(jnp.max(jnp.abs(x2d)) / qmax + 1e-12, (1,)).astype(jnp.float32)
    else:
        x_scale = jnp.ones((1,), jnp.float32)

    # ---- QBertSelfAttention (standard BERT MHA with QLinear projections) ----
    # TODO(synk): QBertSelfAttention source not provided; standard BERT
    # self-attention semantics assumed (no mask / cross-attention / output_attentions).
    qkv = _dense_bias(x2d, w_qkv, b_qkv, x_scale, quantize=quantize, qmax=qmax, tm=tm)
    qkv = qkv.reshape(B, S, 3, num_heads, dh)
    q = jnp.transpose(qkv[:, :, 0], (0, 2, 1, 3)).reshape(B * num_heads, S, dh)
    k = jnp.transpose(qkv[:, :, 1], (0, 2, 1, 3)).reshape(B * num_heads, S, dh)
    v = jnp.transpose(qkv[:, :, 2], (0, 2, 1, 3)).reshape(B * num_heads, S, dh)

    ctx = _attention(q, k, v, sm_scale=1.0 / (dh ** 0.5))          # (B*nH, S, dh)
    ctx2d = jnp.transpose(ctx.reshape(B, num_heads, S, dh), (0, 2, 1, 3)).reshape(M, H)

    # ---- QBertSelfOutput: dense + dropout(eval id) + LayerNorm(+residual) ----
    if quantize:
        ctx_scale = jnp.reshape(jnp.max(jnp.abs(ctx2d)) / qmax + 1e-12, (1,)).astype(jnp.float32)
    else:
        ctx_scale = jnp.ones((1,), jnp.float32)

    out = _self_output(ctx2d, w_out, b_out, x2d, gamma, beta, ctx_scale,
                       quantize=quantize, qmax=qmax, eps=eps, tm=tm)
    return out.reshape(B, S, H)


def init_params(key, hidden_size, dtype=jnp.float32):
    kqw, kqb, kow, kob = jax.random.split(key, 4)
    bound = 1.0 / (hidden_size ** 0.5)               # nn.Linear-like init scale
    w_qkv = jax.random.uniform(kqw, (hidden_size, 3 * hidden_size), dtype, -bound, bound)
    b_qkv = jax.random.uniform(kqb, (1, 3 * hidden_size), dtype, -bound, bound)
    w_out = jax.random.uniform(kow, (hidden_size, hidden_size), dtype, -bound, bound)
    b_out = jax.random.uniform(kob, (1, hidden_size), dtype, -bound, bound)
    gamma = jnp.ones((1, hidden_size), jnp.float32)
    beta = jnp.zeros((1, hidden_size), jnp.float32)
    return {"w_qkv": w_qkv, "b_qkv": b_qkv, "w_out": w_out, "b_out": b_out,
            "gamma": gamma, "beta": beta}


def _reference(hidden_states, params, num_heads, eps=1e-12):
    B, S, H = hidden_states.shape
    dh = H // num_heads
    qkv = jnp.einsum("bsh,hn->bsn", hidden_states, params["w_qkv"]) + params["b_qkv"][0]
    qkv = qkv.reshape(B, S, 3, num_heads, dh)
    q = jnp.transpose(qkv[:, :, 0], (0, 2, 1, 3))
    k = jnp.transpose(qkv[:, :, 1], (0, 2, 1, 3))
    v = jnp.transpose(qkv[:, :, 2], (0, 2, 1, 3))
    s = jnp.einsum("bhqd,bhkd->bhqk", q, k) * (1.0 / dh ** 0.5)
    p = jax.nn.softmax(s, axis=-1)
    ctx = jnp.einsum("bhqk,bhkd->bhqd", p, v)
    ctx = jnp.transpose(ctx, (0, 2, 1, 3)).reshape(B, S, H)
    h = jnp.einsum("bsh,hn->bsn", ctx, params["w_out"]) + params["b_out"][0]
    h = h + hidden_states
    mean = jnp.mean(h, axis=-1, keepdims=True)
    var = jnp.mean((h - mean) ** 2, axis=-1, keepdims=True)
    return (h - mean) * jax.lax.rsqrt(var + eps) * params["gamma"][0] + params["beta"][0]


if __name__ == "__main__":
    # Small config: batch=2, seq=8, hidden=32, heads=2 (head_dim=16).
    B, S, HIDDEN, NUM_HEADS = 2, 8, 32, 2
    key = jax.random.PRNGKey(0)
    k1, k2 = jax.random.split(key)

    hidden_states = jax.random.normal(k1, (B, S, HIDDEN), jnp.float32)
    params = init_params(k2, HIDDEN)

    # jit the whole forward so transposes/reshapes/pads between kernels fuse.
    fwd = jax.jit(functools.partial(qbert_attention, num_heads=NUM_HEADS),
                  static_argnames=("num_bits", "num_grad_bits"))

    # Full-precision path (num_bits=0 -> QLinear behaves like nn.Linear).
    out = fwd(hidden_states, params, num_bits=0, num_grad_bits=0)
    out = jax.block_until_ready(out)
    ref = _reference(hidden_states, params, NUM_HEADS)
    assert out.shape == (B, S, HIDDEN)
    assert jnp.allclose(out, ref, atol=1e-3, rtol=1e-3)

    # Exercise the fused fake-quant path (stand-in for the CPT QLinear quantizer).
    out_q = fwd(hidden_states, params, num_bits=8, num_grad_bits=8)
    out_q = jax.block_until_ready(out_q)
    assert out_q.shape == (B, S, HIDDEN)
    assert bool(jnp.all(jnp.isfinite(out_q)))

    print("KERNEL_OK")
</pallas_src>

<mosaic_0001>
module attributes {stable_mosaic.version = 11 : i64} {
  func.func @_dense_bias_kernel(%arg0: i32, %arg1: memref<1xf32, #tpu.memory_space<smem>>, %arg2: memref<16x32xf32, #tpu.memory_space<vmem>>, %arg3: memref<32x96xf32, #tpu.memory_space<vmem>>, %arg4: memref<1x96xf32, #tpu.memory_space<vmem>>, %arg5: memref<16x96xf32, #tpu.memory_space<vmem>>) attributes {dimension_semantics = [#tpu.dimension_semantics<parallel>], iteration_bounds = array<i64: 1>, scalar_prefetch = 0 : i64, scratch_operands = 0 : i64, tpu.core_type = #tpu.core_type<tc>, window_params = [{transform_indices = @transform_0, window_bounds = array<i64: 1>}, {transform_indices = @transform_1, window_bounds = array<i64: 16, 32>}, {pipeline_mode = #tpu.pipeline_mode<synchronous>, transform_indices = @transform_2, window_bounds = array<i64: 32, 96>}, {pipeline_mode = #tpu.pipeline_mode<synchronous>, transform_indices = @transform_3, window_bounds = array<i64: 1, 96>}, {transform_indices = @transform_4, window_bounds = array<i64: 16, 96>}]} {
    %c0 = arith.constant 0 : index
    %c0_0 = arith.constant 0 : index
    %0 = vector.load %arg2[%c0, %c0_0] : memref<16x32xf32, #tpu.memory_space<vmem>>, vector<16x32xf32>
    %c0_1 = arith.constant 0 : index
    %c0_2 = arith.constant 0 : index
    %1 = vector.load %arg3[%c0_1, %c0_2] : memref<32x96xf32, #tpu.memory_space<vmem>>, vector<32x96xf32>
    %cst = arith.constant dense<0.000000e+00> : vector<16x96xf32>
    %2 = tpu.matmul %0, %1, %cst {dimension_numbers = #tpu.dot_dimension_numbers<[1], [0], [0], [1], [0, 0, 1, 1], [], []>} : vector<16x32xf32>, vector<32x96xf32>, vector<16x96xf32> -> vector<16x96xf32>
    %c0_3 = arith.constant 0 : index
    %c0_4 = arith.constant 0 : index
    %3 = vector.load %arg4[%c0_3, %c0_4] : memref<1x96xf32, #tpu.memory_space<vmem>>, vector<1x96xf32>
    %4 = vector.broadcast %3 : vector<1x96xf32> to vector<16x96xf32>
    %5 = arith.addf %2, %4 : vector<16x96xf32>
    %c0_5 = arith.constant 0 : index
    %c0_6 = arith.constant 0 : index
    %6 = vector.load %arg5[%c0_5, %c0_6] : memref<16x96xf32, #tpu.memory_space<vmem>>, vector<16x96xf32>
    tpu.vector_store %arg5[%c0_5, %c0_6], %5 {strides = array<i32>} : memref<16x96xf32, #tpu.memory_space<vmem>>, vector<16x96xf32>,
    return
  }
  func.func @transform_0(%arg0: i32) -> i32 {
    %c0_i32 = arith.constant 0 : i32
    %c0_i32_0 = arith.constant 0 : i32
    return %c0_i32 : i32
  }
  func.func @transform_1(%arg0: i32) -> (i32, i32) {
    %c0_i32 = arith.constant 0 : i32
    %c0_i32_0 = arith.constant 0 : i32
    return %arg0, %c0_i32 : i32, i32
  }
  func.func @transform_2(%arg0: i32) -> (i32, i32) {
    %c0_i32 = arith.constant 0 : i32
    %c0_i32_0 = arith.constant 0 : i32
    %c0_i32_1 = arith.constant 0 : i32
    return %c0_i32, %c0_i32_0 : i32, i32
  }
  func.func @transform_3(%arg0: i32) -> (i32, i32) {
    %c0_i32 = arith.constant 0 : i32
    %c0_i32_0 = arith.constant 0 : i32
    %c0_i32_1 = arith.constant 0 : i32
    return %c0_i32, %c0_i32_0 : i32, i32
  }
  func.func @transform_4(%arg0: i32) -> (i32, i32) {
    %c0_i32 = arith.constant 0 : i32
    %c0_i32_0 = arith.constant 0 : i32
    return %arg0, %c0_i32 : i32, i32
  }
}

module attributes {stable_mosaic.version = 11 : i64} {
  func.func @_attention_kernel(%arg0: i32, %arg1: memref<1x8x16xf32, #tpu.memory_space<vmem>>, %arg2: memref<1x8x16xf32, #tpu.memory_space<vmem>>, %arg3: memref<1x8x16xf32, #tpu.memory_space<vmem>>, %arg4: memref<1x8x16xf32, #tpu.memory_space<vmem>>) attributes {dimension_semantics = [#tpu.dimension_semantics<parallel>], iteration_bounds = array<i64: 4>, scalar_prefetch = 0 : i64, scratch_operands = 0 : i64, tpu.core_type = #tpu.core_type<tc>, window_params = [{transform_indices = @transform_0, window_bounds = array<i64: 1, 8, 16>}, {transform_indices = @transform_1, window_bounds = array<i64: 1, 8, 16>}, {transform_indices = @transform_2, window_bounds = array<i64: 1, 8, 16>}, {transform_indices = @transform_3, window_bounds = array<i64: 1, 8, 16>}]} {
    %c0 = arith.constant 0 : index
    %c0_0 = arith.constant 0 : index
    %c0_1 = arith.constant 0 : index
    %0 = vector.load %arg1[%c0, %c0_0, %c0_1] : memref<1x8x16xf32, #tpu.memory_space<vmem>>, vector<1x8x16xf32>
    %1 = vector.shape_cast %0 : vector<1x8x16xf32> to vector<8x16xf32>
    %c0_2 = arith.constant 0 : index
    %c0_3 = arith.constant 0 : index
    %c0_4 = arith.constant 0 : index
    %2 = vector.load %arg2[%c0_2, %c0_3, %c0_4] : memref<1x8x16xf32, #tpu.memory_space<vmem>>, vector<1x8x16xf32>
    %3 = vector.shape_cast %2 : vector<1x8x16xf32> to vector<8x16xf32>
    %c0_5 = arith.constant 0 : index
    %c0_6 = arith.constant 0 : index
    %c0_7 = arith.constant 0 : index
    %4 = vector.load %arg3[%c0_5, %c0_6, %c0_7] : memref<1x8x16xf32, #tpu.memory_space<vmem>>, vector<1x8x16xf32>
    %5 = vector.shape_cast %4 : vector<1x8x16xf32> to vector<8x16xf32>
    %6 = tpu.transpose %3, [1, 0] : vector<8x16xf32> -> vector<16x8xf32>
    %cst = arith.constant dense<0.000000e+00> : vector<8x8xf32>
    %7 = tpu.matmul %1, %6, %cst {dimension_numbers = #tpu.dot_dimension_numbers<[1], [0], [0], [1], [0, 0, 1, 1], [], []>} : vector<8x16xf32>, vector<16x8xf32>, vector<8x8xf32> -> vector<8x8xf32>
    %cst_8 = arith.constant 2.500000e-01 : f32
    %8 = vector.broadcast %cst_8 : f32 to vector<8x8xf32>
    %9 = arith.mulf %7, %8 : vector<8x8xf32>
    %cst_9 = arith.constant dense<0xFF800000> : vector<8xf32>
    %10 = vector.multi_reduction <maximumf>, %9, %cst_9 [1] : vector<8x8xf32> to vector<8xf32>
    %11 = vector.shape_cast %10 : vector<8xf32> to vector<8x1xf32>
    %12 = vector.broadcast %11 : vector<8x1xf32> to vector<8x8xf32>
    %13 = arith.subf %9, %12 : vector<8x8xf32>
    %14 = math.exp %13 : vector<8x8xf32>
    %cst_10 = arith.constant dense<0.000000e+00> : vector<8xf32>
    %15 = vector.multi_reduction <add>, %14, %cst_10 [1] : vector<8x8xf32> to vector<8xf32>
    %16 = vector.shape_cast %15 : vector<8xf32> to vector<8x1xf32>
    %17 = vector.broadcast %16 : vector<8x1xf32> to vector<8x8xf32>
    %18 = arith.divf %14, %17 : vector<8x8xf32>
    %cst_11 = arith.constant dense<0.000000e+00> : vector<8x16xf32>
    %19 = tpu.matmul %18, %5, %cst_11 {dimension_numbers = #tpu.dot_dimension_numbers<[1], [0], [0], [1], [0, 0, 1, 1], [], []>} : vector<8x8xf32>, vector<8x16xf32>, vector<8x16xf32> -> vector<8x16xf32>
    %c0_12 = arith.constant 0 : index
    %c0_13 = arith.constant 0 : index
    %c0_14 = arith.constant 0 : index
    %20 = vector.load %arg4[%c0_12, %c0_13, %c0_14] : memref<1x8x16xf32, #tpu.memory_space<vmem>>, vector<1x8x16xf32>
    %21 = vector.shape_cast %20 : vector<1x8x16xf32> to vector<8x16xf32>
    %22 = vector.shape_cast %19 : vector<8x16xf32> to vector<1x8x16xf32>
    tpu.vector_store %arg4[%c0_12, %c0_13, %c0_14], %22 {strides = array<i32>} : memref<1x8x16xf32, #tpu.memory_space<vmem>>, vector<1x8x16xf32>,
    return
  }
  func.func @transform_0(%arg0: i32) -> (i32, i32, i32) {
    %c0_i32 = arith.constant 0 : i32
    %c0_i32_0 = arith.constant 0 : i32
    %c0_i32_1 = arith.constant 0 : i32
    return %arg0, %c0_i32, %c0_i32_0 : i32, i32, i32
  }
  func.func @transform_1(%arg0: i32) -> (i32, i32, i32) {
    %c0_i32 = arith.constant 0 : i32
    %c0_i32_0 = arith.constant 0 : i32
    %c0_i32_1 = arith.constant 0 : i32
    return %arg0, %c0_i32, %c0_i32_0 : i32, i32, i32
  }
  func.func @transform_2(%arg0: i32) -> (i32, i32, i32) {
    %c0_i32 = arith.constant 0 : i32
    %c0_i32_0 = arith.constant 0 : i32
    %c0_i32_1 = arith.constant 0 : i32
    return %arg0, %c0_i32, %c0_i32_0 : i32, i32, i32
  }
  func.func @transform_3(%arg0: i32) -> (i32, i32, i32) {
    %c0_i32 = arith.constant 0 : i32
    %c0_i32_0 = arith.constant 0 : i32
    %c0_i32_1 = arith.constant 0 : i32
    return %arg0, %c0_i32, %c0_i32_0 : i32, i32, i32
  }
}

module attributes {stable_mosaic.version = 11 : i64} {
  func.func @_self_output_kernel(%arg0: i32, %arg1: memref<1xf32, #tpu.memory_space<smem>>, %arg2: memref<16x32xf32, #tpu.memory_space<vmem>>, %arg3: memref<32x32xf32, #tpu.memory_space<vmem>>, %arg4: memref<1x32xf32, #tpu.memory_space<vmem>>, %arg5: memref<16x32xf32, #tpu.memory_space<vmem>>, %arg6: memref<1x32xf32, #tpu.memory_space<vmem>>, %arg7: memref<1x32xf32, #tpu.memory_space<vmem>>, %arg8: memref<16x32xf32, #tpu.memory_space<vmem>>) attributes {dimension_semantics = [#tpu.dimension_semantics<parallel>], iteration_bounds = array<i64: 1>, scalar_prefetch = 0 : i64, scratch_operands = 0 : i64, tpu.core_type = #tpu.core_type<tc>, window_params = [{transform_indices = @transform_0, window_bounds = array<i64: 1>}, {transform_indices = @transform_1, window_bounds = array<i64: 16, 32>}, {pipeline_mode = #tpu.pipeline_mode<synchronous>, transform_indices = @transform_2, window_bounds = array<i64: 32, 32>}, {pipeline_mode = #tpu.pipeline_mode<synchronous>, transform_indices = @transform_3, window_bounds = array<i64: 1, 32>}, {transform_indices = @transform_4, window_bounds = array<i64: 16, 32>}, {pipeline_mode = #tpu.pipeline_mode<synchronous>, transform_indices = @transform_5, window_bounds = array<i64: 1, 32>}, {pipeline_mode = #tpu.pipeline_mode<synchronous>, transform_indices = @transform_6, window_bounds = array<i64: 1, 32>}, {transform_indices = @transform_7, window_bounds = array<i64: 16, 32>}]} {
    %c0 = arith.constant 0 : index
    %c0_0 = arith.constant 0 : index
    %0 = vector.load %arg2[%c0, %c0_0] : memref<16x32xf32, #tpu.memory_space<vmem>>, vector<16x32xf32>
    %c0_1 = arith.constant 0 : index
    %c0_2 = arith.constant 0 : index
    %1 = vector.load %arg3[%c0_1, %c0_2] : memref<32x32xf32, #tpu.memory_space<vmem>>, vector<32x32xf32>
    %cst = arith.constant dense<0.000000e+00> : vector<16x32xf32>
    %2 = tpu.matmul %0, %1, %cst {dimension_numbers = #tpu.dot_dimension_numbers<[1], [0], [0], [1], [0, 0, 1, 1], [], []>} : vector<16x32xf32>, vector<32x32xf32>, vector<16x32xf32> -> vector<16x32xf32>
    %c0_3 = arith.constant 0 : index
    %c0_4 = arith.constant 0 : index
    %3 = vector.load %arg4[%c0_3, %c0_4] : memref<1x32xf32, #tpu.memory_space<vmem>>, vector<1x32xf32>
    %4 = vector.broadcast %3 : vector<1x32xf32> to vector<16x32xf32>
    %5 = arith.addf %2, %4 : vector<16x32xf32>
    %c0_5 = arith.constant 0 : index
    %c0_6 = arith.constant 0 : index
    %6 = vector.load %arg5[%c0_5, %c0_6] : memref<16x32xf32, #tpu.memory_space<vmem>>, vector<16x32xf32>
    %7 = arith.addf %5, %6 : vector<16x32xf32>
    %cst_7 = arith.constant dense<0.000000e+00> : vector<16xf32>
    %8 = vector.multi_reduction <add>, %7, %cst_7 [1] : vector<16x32xf32> to vector<16xf32>
    %9 = vector.shape_cast %8 : vector<16xf32> to vector<16x1xf32>
    %cst_8 = arith.constant 3.200000e+01 : f32
    %10 = vector.broadcast %cst_8 : f32 to vector<16x1xf32>
    %11 = arith.divf %9, %10 : vector<16x1xf32>
    %12 = vector.broadcast %11 : vector<16x1xf32> to vector<16x32xf32>
    %13 = arith.subf %7, %12 : vector<16x32xf32>
    %14 = arith.mulf %13, %13 : vector<16x32xf32>
    %cst_9 = arith.constant dense<0.000000e+00> : vector<16xf32>
    %15 = vector.multi_reduction <add>, %14, %cst_9 [1] : vector<16x32xf32> to vector<16xf32>
    %16 = vector.shape_cast %15 : vector<16xf32> to vector<16x1xf32>
    %cst_10 = arith.constant 3.200000e+01 : f32
    %17 = vector.broadcast %cst_10 : f32 to vector<16x1xf32>
    %18 = arith.divf %16, %17 : vector<16x1xf32>
    %cst_11 = arith.constant 9.99999996E-13 : f32
    %19 = vector.broadcast %cst_11 : f32 to vector<16x1xf32>
    %20 = arith.addf %18, %19 : vector<16x1xf32>
    %21 = math.rsqrt %20 : vector<16x1xf32>
    %22 = vector.broadcast %21 : vector<16x1xf32> to vector<16x32xf32>
    %23 = arith.mulf %13, %22 : vector<16x32xf32>
    %c0_12 = arith.constant 0 : index
    %c0_13 = arith.constant 0 : index
    %24 = vector.load %arg6[%c0_12, %c0_13] : memref<1x32xf32, #tpu.memory_space<vmem>>, vector<1x32xf32>
    %25 = vector.broadcast %24 : vector<1x32xf32> to vector<16x32xf32>
    %26 = arith.mulf %23, %25 : vector<16x32xf32>
    %c0_14 = arith.constant 0 : index
    %c0_15 = arith.constant 0 : index
    %27 = vector.load %arg7[%c0_14, %c0_15] : memref<1x32xf32, #tpu.memory_space<vmem>>, vector<1x32xf32>
    %28 = vector.broadcast %27 : vector<1x32xf32> to vector<16x32xf32>
    %29 = arith.addf %26, %28 : vector<16x32xf32>
    %c0_16 = arith.constant 0 : index
    %c0_17 = arith.constant 0 : index
    %30 = vector.load %arg8[%c0_16, %c0_17] : memref<16x32xf32, #tpu.memory_space<vmem>>, vector<16x32xf32>
    tpu.vector_store %arg8[%c0_16, %c0_17], %29 {strides = array<i32>} : memref<16x32xf32, #tpu.memory_space<vmem>>, vector<16x32xf32>,
    return
  }
  func.func @transform_0(%arg0: i32) -> i32 {
    %c0_i32 = arith.constant 0 : i32
    %c0_i32_0 = arith.constant 0 : i32
    return %c0_i32 : i32
  }
  func.func @transform_1(%arg0: i32) -> (i32, i32) {
    %c0_i32 = arith.constant 0 : i32
    %c0_i32_0 = arith.constant 0 : i32
    return %arg0, %c0_i32 : i32, i32
  }
  func.func @transform_2(%arg0: i32) -> (i32, i32) {
    %c0_i32 = arith.constant 0 : i32
    %c0_i32_0 = arith.constant 0 : i32
    %c0_i32_1 = arith.constant 0 : i32
    return %c0_i32, %c0_i32_0 : i32, i32
  }
  func.func @transform_3(%arg0: i32) -> (i32, i32) {
    %c0_i32 = arith.constant 0 : i32
    %c0_i32_0 = arith.constant 0 : i32
    %c0_i32_1 = arith.constant 0 : i32
    return %c0_i32, %c0_i32_0 : i32, i32
  }
  func.func @transform_4(%arg0: i32) -> (i32, i32) {
    %c0_i32 = arith.constant 0 : i32
    %c0_i32_0 = arith.constant 0 : i32
    return %arg0, %c0_i32 : i32, i32
  }
  func.func @transform_5(%arg0: i32) -> (i32, i32) {
    %c0_i32 = arith.constant 0 : i32
    %c0_i32_0 = arith.constant 0 : i32
    %c0_i32_1 = arith.constant 0 : i32
    return %c0_i32, %c0_i32_0 : i32, i32
  }
  func.func @transform_6(%arg0: i32) -> (i32, i32) {
    %c0_i32 = arith.constant 0 : i32
    %c0_i32_0 = arith.constant 0 : i32
    %c0_i32_1 = arith.constant 0 : i32
    return %c0_i32, %c0_i32_0 : i32, i32
  }
  func.func @transform_7(%arg0: i32) -> (i32, i32) {
    %c0_i32 = arith.constant 0 : i32
    %c0_i32_0 = arith.constant 0 : i32
    return %arg0, %c0_i32 : i32, i32
  }
}

</mosaic_0001>

<llo_original>
// kernel: qbert_attention.3
$region0: #{qbert_attention.3}
  #allocation0 [shape = 'u32[]', space=smem, size = 0x4, offset = 0x4, fixed_abs, tag = 'smem constant byte address 0x4 - core index']
  #allocation1 [shape = 'u32[72,128]{1,0:T(1,128)}', space=vmem, size = 0x9000, scoped, tag = 'internal scratch']
  #allocation2 [shape = 'f32[1]{0:T(128)S(6)}', space=smem, size = 0x200, scoped, tag = 'scoped memory for qbert_attention.3']
  %s0 = inlined_call_operand.<no memory space> [shape: f32[1], index: 0, kind: input, shape index: {}]
  %s1 = inlined_call_operand.hbm [shape: f32[16,32], index: 1, kind: input, shape index: {}]
  %s2 = inlined_call_operand.hbm [shape: f32[32,96], index: 2, kind: input, shape index: {}]
  %s3 = inlined_call_operand.vmem [shape: f32[1,96], index: 3, kind: input, shape index: {}]
  %s4 = inlined_call_operand.vmem [shape: f32[16,96], index: 4, kind: output, shape index: {}]
  %s5 = sld [smem:[#allocation0]]
  $region34: #{qbert_attention.3} parent=0
    _
  %s7 = ssub.s32 1, %s5
  %s8 = scalar_select 0, %s7, %s5
  %9 = sst [smem:[#allocation2]] %s0
  $region1: #{qbert_attention.3} parent=0
    #allocation3 [shape = 'u8[8192]{0}', space=vmem, size = 0x2000, scoped, tag = 'input window, operand 1, single buffered']
    #allocation4 [shape = 's32[1]{0}', space=sflag, size = 0x4, scoped, tag = 'scoped memory for qbert_attention.3']
    #allocation5 [shape = 'u8[16384]{0}', space=vmem, size = 0x4000, scoped, tag = 'input window, operand 2, single buffered']
    #allocation6 [shape = 's32[1]{0}', space=sflag, size = 0x4, scoped, tag = 'scoped memory for qbert_attention.3']
    %10 = vsyncpa [#allocation4], 0
    %11 = vsyncpa [#allocation6], 0
    // Predicated region
    $region2: #{qbert_attention.3} parent=1 // pred_check
      _
    $region3: #{qbert_attention.3} parent=1 // pred_check_branch
      %13 = sbr.rel (0) target = $region5
    $region4: #{qbert_attention.3} parent=1 // pred_region
      _
    $region5: #{qbert_attention.3} parent=1 // pred_fallthru
      _
    // Predicated region
    $region6: #{qbert_attention.3} parent=1 // pred_check
      _
    $region7: #{qbert_attention.3} parent=1 // pred_check_branch
      %15 = sbr.rel (0) target = $region9
    $region8: #{qbert_attention.3} parent=1 // pred_region
      %17 = vsyncadd [#allocation4], 0
      %s18 = sshll.u32 %s1, 4
      %s19 = int_to_ptr.hbm [resolvable:$true] %s18
      %s20 = sshll.u32 [#allocation3], 4
      %s21 = int_to_ptr.vmem [resolvable:$true] %s20
      %26 = dma.hbm_to_vmem [thread:$0]  %s19, 256, %s21, [#allocation4], 128, 128, 8
    $region9: #{qbert_attention.3} parent=1 // pred_fallthru
      _
    // Predicated region
    $region10: #{qbert_attention.3} parent=1 // pred_check
      _
    $region11: #{qbert_attention.3} parent=1 // pred_check_branch
      %28 = sbr.rel (0) target = $region13
    $region12: #{qbert_attention.3} parent=1 // pred_region
      %30 = vsyncadd [#allocation6], 0
      %s31 = sshll.u32 %s2, 4
      %s32 = int_to_ptr.hbm [resolvable:$true] %s31
      %s33 = sshll.u32 [#allocation5], 4
      %s34 = int_to_ptr.vmem [resolvable:$true] %s33
      %39 = dma.hbm_to_vmem [thread:$0]  %s32, 512, %s34, [#allocation6], 128, 128, 8
    $region13: #{qbert_attention.3} parent=1 // pred_fallthru
      _
    // Predicated region
    $region14: #{qbert_attention.3} parent=1 // pred_check
      _
    $region15: #{qbert_attention.3} parent=1 // pred_check_branch
      %41 = sbr.rel (0) target = $region17
    $region16: #{qbert_attention.3} parent=1 // pred_region
      _
    $region17: #{qbert_attention.3} parent=1 // pred_fallthru
      _
    // Predicated region
    $region18: #{qbert_attention.3} parent=1 // pred_check
      _
    $region19: #{qbert_attention.3} parent=1 // pred_check_branch
      %43 = sbr.rel (0) target = $region21
    $region20: #{qbert_attention.3} parent=1 // pred_region
      %45 = dma.done [#allocation4], 256
    $region21: #{qbert_attention.3} parent=1 // pred_fallthru
      _
    // Predicated region
    $region22: #{qbert_attention.3} parent=1 // pred_check
      _
    $region23: #{qbert_attention.3} parent=1 // pred_check_branch
      %47 = sbr.rel (0) target = $region25
    $region24: #{qbert_attention.3} parent=1 // pred_region
      %49 = dma.done [#allocation6], 512
    $region25: #{qbert_attention.3} parent=1 // pred_fallthru
      _
    %v50 = vld [vmem:[#allocation3] sm:$0xff]
    %v51 = vld [vmem:[#allocation3 + $0x8] sm:$0xff]
    %v52 = vld [vmem:[#allocation5] sm:$0xff]
    %v53 = vld [vmem:[#allocation5 + $0x8] sm:$0xff]
    %v54 = vld [vmem:[#allocation5 + $0x10] sm:$0xff]
    %v55 = vld [vmem:[#allocation5 + $0x18] sm:$0xff]
    %v56 = vld [vmem:[%s3] sm:$0x1]
    %v58 = vperm.slane %v56, 0
    %vm60 = vcmask 261120
    %v62 = vsel %vm60, %v50, 0
    %v65 = vsel %vm60, %v51, 0
    %67 = vmatpush.msra.mxu0 0.0
    %68 = vmatpush.msra.mxu0 0.0
    %69 = vmatpush.msra.mxu0 0.0
    %70 = vmatpush.msra.mxu0 0.0
    %71 = vmatpush.msra.mxu0 0.0
    %72 = vmatpush.msra.mxu0 0.0
    %73 = vmatpush.msra.mxu0 0.0
    %74 = vmatpush.msra.mxu0 0.0
    %75 = vmatpush.msra.mxu0 0.0
    %76 = vmatpush.msra.mxu0 0.0
    %77 = vmatpush.msra.mxu0 0.0
    %78 = vmatpush.msra.mxu0 0.0
    %79 = vmatpush.msra.mxu0 %v55
    %80 = vmatpush.msra.mxu0 %v54
    %81 = vmatpush.msra.mxu0 %v53
    %82 = vmatpush.msra.mxu0 %v52
    %83 = vmatmul.f32.gmra.mxu0 %v62
    %v84 = vpop.f32.mrf.mxu0
    %v85 = vadd.f32 %v58, %v84
    %86 = vmatmul.f32.gmra.mxu0 %v65
    %v87 = vpop.f32.mrf.mxu0
    %v88 = vadd.f32 %v58, %v87
    %89 = vdwg.mxu0
    %vm90 = vcmask 785408
    %91 = vst.msk [vmem:[%s4] sm:$0xff] %vm90, %v85
    %92 = vst.msk [vmem:[%s4 + $0x8] sm:$0xff] %vm90, %v88
    // Predicated region
    $region26: #{qbert_attention.3} parent=1 // pred_check
      _
    $region27: #{qbert_attention.3} parent=1 // pred_check_branch
      %94 = sbr.rel (0) target = $region29
    $region28: #{qbert_attention.3} parent=1 // pred_region
      _
    $region29: #{qbert_attention.3} parent=1 // pred_fallthru
      _
    // Predicated region
    $region30: #{qbert_attention.3} parent=1 // pred_check
      _
    $region31: #{qbert_attention.3} parent=1 // pred_check_branch
      %96 = sbr.rel (0) target = $region33
    $region32: #{qbert_attention.3} parent=1 // pred_region
      _
    $region33: #{qbert_attention.3} parent=1 // pred_fallthru
      _
    %97 = vsyncpa [#allocation4], 1
    %98 = vsyncpa [#allocation6], 1

// kernel: qbert_attention.4
$region0: #{qbert_attention.4}
  #allocation0 [shape = 'u32[]', space=smem, size = 0x4, offset = 0x4, fixed_abs, tag = 'smem constant byte address 0x4 - core index']
  #allocation1 [shape = 'u32[72,128]{1,0:T(1,128)}', space=vmem, size = 0x9000, scoped, tag = 'internal scratch']
  %s0 = inlined_call_operand.vmem [shape: f32[4,8,16], index: 0, kind: input, shape index: {}]
  %s1 = inlined_call_operand.vmem [shape: f32[4,8,16], index: 1, kind: input, shape index: {}]
  %s2 = inlined_call_operand.vmem [shape: f32[4,8,16], index: 2, kind: input, shape index: {}]
  %s3 = inlined_call_operand.vmem [shape: f32[4,8,16], index: 3, kind: output, shape index: {}]
  %s4 = sld [smem:[#allocation0]]
  $region45: #{qbert_attention.4} parent=0
    _
  %s6 = ssub.s32 1, %s4
  %s7 = scalar_select 0, %s6, %s4
  loop: start=0, step=1, limit=6
  $region2: #{qbert_attention.4} parent=0 // loop_pre_header
    _
  $region3: #{qbert_attention.4} parent=0 // loop_header
    %s9 = sphi 0, %s13
    %p10 = scmp.ge.s32.totalorder %s9, 6
    %s19 = sphi 0, %s21
    %s22 = sphi 0, %s19
    %s23 = sphi 0, %s22
    %s39 = sphi 0, %s23
    %s45 = sphi 0, %s47
    %s48 = sphi 0, %s45
    %s49 = sphi 0, %s48
    %s65 = sphi 0, %s49
    %s71 = sphi 0, %s73
    %s74 = sphi 0, %s71
    %s75 = sphi 0, %s74
    %s91 = sphi 0, %s75
    %s97 = sphi 0, %s99
    %s100 = sphi 0, %s97
    %s101 = sphi 0, %s100
    %s117 = sphi 0, %s101
  $region4: #{qbert_attention.4} parent=0 // loop_header_branch
    %12 = sbr.rel (%p10) target = $region8
  $region5: #{qbert_attention.4} parent=0 // loop_body
    %s14 = ssub.s32 %s9, 1
    %s15 = ssub.s32 %s9, 2
    %s16 = sadd.s32 %s9, 1
    %s17 = ssub.s32 %s9, %s16
    %p18 = scmp.eq.s32.totalorder %s17, 0
    %s20 = sadd.s32 %s19, 1
    %s21 = scalar_select %p18, %s19, %s20
    %p24 = pneg %p18
    %p25 = scmp.eq.s32.totalorder %s9, 3
    %p26 = por %p24, %p25
    %p27 = scmp.ne.s32.totalorder %s19, %s22
    %p28 = scmp.eq.s32.totalorder %s9, 0
    %p29 = por %p27, %p28
    %p30 = scmp.ne.s32.totalorder %s19, %s22
    %p31 = scmp.eq.s32.totalorder %s14, 3
    %p32 = por %p30, %p31
    %p33 = scmp.ne.s32.totalorder %s22, %s23
    %p34 = scmp.eq.s32.totalorder %s14, 0
    %p35 = por %p33, %p34
    %p36 = scmp.ne.s32.totalorder %s22, %s23
    %p37 = scmp.eq.s32.totalorder %s15, 3
    %p38 = por %p36, %p37
    %p40 = scmp.ne.s32.totalorder %s23, %s39
    %p41 = scmp.eq.s32.totalorder %s15, 0
    %p42 = por %p40, %p41
    %s43 = ssub.s32 %s9, %s16
    %p44 = scmp.eq.s32.totalorder %s43, 0
    %s46 = sadd.s32 %s45, 1
    %s47 = scalar_select %p44, %s45, %s46
    %p50 = pneg %p44
    %p51 = scmp.eq.s32.totalorder %s9, 3
    %p52 = por %p50, %p51
    %p53 = scmp.ne.s32.totalorder %s45, %s48
    %p54 = scmp.eq.s32.totalorder %s9, 0
    %p55 = por %p53, %p54
    %p56 = scmp.ne.s32.totalorder %s45, %s48
    %p57 = scmp.eq.s32.totalorder %s14, 3
    %p58 = por %p56, %p57
    %p59 = scmp.ne.s32.totalorder %s48, %s49
    %p60 = scmp.eq.s32.totalorder %s14, 0
    %p61 = por %p59, %p60
    %p62 = scmp.ne.s32.totalorder %s48, %s49
    %p63 = scmp.eq.s32.totalorder %s15, 3
    %p64 = por %p62, %p63
    %p66 = scmp.ne.s32.totalorder %s49, %s65
    %p67 = scmp.eq.s32.totalorder %s15, 0
    %p68 = por %p66, %p67
    %s69 = ssub.s32 %s9, %s16
    %p70 = scmp.eq.s32.totalorder %s69, 0
    %s72 = sadd.s32 %s71, 1
    %s73 = scalar_select %p70, %s71, %s72
    %p76 = pneg %p70
    %p77 = scmp.eq.s32.totalorder %s9, 3
    %p78 = por %p76, %p77
    %p79 = scmp.ne.s32.totalorder %s71, %s74
    %p80 = scmp.eq.s32.totalorder %s9, 0
    %p81 = por %p79, %p80
    %p82 = scmp.ne.s32.totalorder %s71, %s74
    %p83 = scmp.eq.s32.totalorder %s14, 3
    %p84 = por %p82, %p83
    %p85 = scmp.ne.s32.totalorder %s74, %s75
    %p86 = scmp.eq.s32.totalorder %s14, 0
    %p87 = por %p85, %p86
    %p88 = scmp.ne.s32.totalorder %s74, %s75
    %p89 = scmp.eq.s32.totalorder %s15, 3
    %p90 = por %p88, %p89
    %p92 = scmp.ne.s32.totalorder %s75, %s91
    %p93 = scmp.eq.s32.totalorder %s15, 0
    %p94 = por %p92, %p93
    %s95 = ssub.s32 %s9, %s16
    %p96 = scmp.eq.s32.totalorder %s95, 0
    %s98 = sadd.s32 %s97, 1
    %s99 = scalar_select %p96, %s97, %s98
    %p102 = pneg %p96
    %p103 = scmp.eq.s32.totalorder %s9, 3
    %p104 = por %p102, %p103
    %p105 = scmp.ne.s32.totalorder %s97, %s100
    %p106 = scmp.eq.s32.totalorder %s9, 0
    %p107 = por %p105, %p106
    %p108 = scmp.ne.s32.totalorder %s97, %s100
    %p109 = scmp.eq.s32.totalorder %s14, 3
    %p110 = por %p108, %p109
    %p111 = scmp.ne.s32.totalorder %s100, %s101
    %p112 = scmp.eq.s32.totalorder %s14, 0
    %p113 = por %p111, %p112
    %p114 = scmp.ne.s32.totalorder %s100, %s101
    %p115 = scmp.eq.s32.totalorder %s15, 3
    %p116 = por %p114, %p115
    %p118 = scmp.ne.s32.totalorder %s101, %s117
    %p119 = scmp.eq.s32.totalorder %s15, 0
    %p120 = por %p118, %p119
    %p121 = scmp.le.s32.totalorder 1, %s9
    %p122 = scmp.lt.s32.totalorder %s9, 5
    %p123 = pnand %p121, %p122
    %p124 = pneg %p123
    // Predicated region
    $region9: #{qbert_attention.4} parent=5 // pred_check
      _
    $region10: #{qbert_attention.4} parent=5 // pred_check_branch
      %126 = sbr.rel (%p123) target = $region12
    $region11: #{qbert_attention.4} parent=5 // pred_region
      %s127 = ssub.s32 %s9, 1
    $region12: #{qbert_attention.4} parent=5 // pred_fallthru
      _
    %p128 = scmp.lt.s32.totalorder %s9, 4
    // Predicated region
    $region13: #{qbert_attention.4} parent=5 // pred_check
      %p129 = pneg %p128
    $region14: #{qbert_attention.4} parent=5 // pred_check_branch
      %131 = sbr.rel (%p129) target = $region16
    $region15: #{qbert_attention.4} parent=5 // pred_region
      // Predicated region
      $region17: #{qbert_attention.4} parent=15 // pred_check
        %p132 = pneg %p29
      $region18: #{qbert_attention.4} parent=15 // pred_check_branch
        %134 = sbr.rel (%p132) target = $region20
      $region19: #{qbert_attention.4} parent=15 // pred_region
        %p135 = scmp.lt.s32.totalorder %s9, 3
        %s136 = scalar_select %p135, %s9, 3
        %s137 = smul.addr %s136, 8
        %s138 = scalar_lea.vmem %s0, %s137
      $region20: #{qbert_attention.4} parent=15 // pred_fallthru
        _
      // Predicated region
      $region21: #{qbert_attention.4} parent=15 // pred_check
        %p139 = pneg %p55
      $region22: #{qbert_attention.4} parent=15 // pred_check_branch
        %141 = sbr.rel (%p139) target = $region24
      $region23: #{qbert_attention.4} parent=15 // pred_region
        %p142 = scmp.lt.s32.totalorder %s9, 3
        %s143 = scalar_select %p142, %s9, 3
        %s144 = smul.addr %s143, 8
        %s145 = scalar_lea.vmem %s1, %s144
      $region24: #{qbert_attention.4} parent=15 // pred_fallthru
        _
      // Predicated region
      $region25: #{qbert_attention.4} parent=15 // pred_check
        %p146 = pneg %p81
      $region26: #{qbert_attention.4} parent=15 // pred_check_branch
        %148 = sbr.rel (%p146) target = $region28
      $region27: #{qbert_attention.4} parent=15 // pred_region
        %p149 = scmp.lt.s32.totalorder %s9, 3
        %s150 = scalar_select %p149, %s9, 3
        %s151 = smul.addr %s150, 8
        %s152 = scalar_lea.vmem %s2, %s151
      $region28: #{qbert_attention.4} parent=15 // pred_fallthru
        _
    $region16: #{qbert_attention.4} parent=5 // pred_fallthru
      _
    %p153 = scmp.le.s32.totalorder 1, %s9
    %p154 = scmp.lt.s32.totalorder %s9, 5
    %p155 = pnand %p153, %p154
    %p156 = pneg %p155
    // Predicated region
    $region29: #{qbert_attention.4} parent=5 // pred_check
      _
    $region30: #{qbert_attention.4} parent=5 // pred_check_branch
      %158 = sbr.rel (%p155) target = $region32
    $region31: #{qbert_attention.4} parent=5 // pred_region
      %s159 = ssub.s32 %s9, 1
      %p160 = scmp.lt.s32.totalorder %s14, 3
      %s161 = scalar_select %p160, %s14, 3
      %s162 = smul.addr %s161, 8
      %s163 = scalar_lea.vmem %s0, %s162
      %p164 = pneg %p35
      %p165 = pneg %p32
      %p166 = scmp.lt.s32.totalorder %s14, 3
      %s167 = scalar_select %p166, %s14, 3
      %s168 = smul.addr %s167, 8
      %s169 = scalar_lea.vmem %s1, %s168
      %p170 = pneg %p61
      %p171 = pneg %p58
      %p172 = scmp.lt.s32.totalorder %s14, 3
      %s173 = scalar_select %p172, %s14, 3
      %s174 = smul.addr %s173, 8
      %s175 = scalar_lea.vmem %s2, %s174
      %p176 = pneg %p87
      %p177 = pneg %p84
      %p178 = pneg %p113
      %p179 = pneg %p110
      %p180 = scmp.lt.s32.totalorder %s14, 3
      %s181 = scalar_select %p180, %s14, 3
      %s182 = smul.addr %s181, 8
      %s183 = scalar_lea.vmem %s3, %s182
      %p184 = scmp.lt.s32.totalorder %s14, 3
      %s185 = scalar_select %p184, %s14, 3
      %s186 = smul.addr %s185, 8
      %s187 = scalar_lea.vmem %s0, %s186
      %p188 = scmp.lt.s32.totalorder %s14, 3
      %s189 = scalar_select %p188, %s14, 3
      %s190 = smul.addr %s189, 8
      %s191 = scalar_lea.vmem %s1, %s190
      %p192 = scmp.lt.s32.totalorder %s14, 3
      %s193 = scalar_select %p192, %s14, 3
      %s194 = smul.addr %s193, 8
      %s195 = scalar_lea.vmem %s2, %s194
      %p196 = scmp.lt.s32.totalorder %s14, 3
      %s197 = scalar_select %p196, %s14, 3
      %s198 = smul.addr %s197, 8
      %s199 = scalar_lea.vmem %s3, %s198
      %v200 = vld [vmem:[%s187] sm:$0xff]
      %v201 = vld [vmem:[%s191] sm:$0xff]
      %v202 = vld [vmem:[%s195] sm:$0xff]
      %vm203 = vcmask 130048
      %v205 = vsel %vm203, %v200, 0
      %v208 = vsel %vm203, %v201, 0
      %210 = vmatpush.xpose.msra.mxu0 0.0
      %211 = vmatpush.xpose.msra.mxu0 0.0
      %212 = vmatpush.xpose.msra.mxu0 0.0
      %213 = vmatpush.xpose.msra.mxu0 0.0
      %214 = vmatpush.xpose.msra.mxu0 0.0
      %215 = vmatpush.xpose.msra.mxu0 0.0
      %216 = vmatpush.xpose.msra.mxu0 0.0
      %217 = vmatpush.xpose.msra.mxu0 0.0
      %218 = vmatpush.xpose.msra.mxu0 0.0
      %219 = vmatpush.xpose.msra.mxu0 0.0
      %220 = vmatpush.xpose.msra.mxu0 0.0
      %221 = vmatpush.xpose.msra.mxu0 0.0
      %222 = vmatpush.xpose.msra.mxu0 0.0
      %223 = vmatpush.xpose.msra.mxu0 0.0
      %224 = vmatpush.xpose.msra.mxu0 0.0
      %225 = vmatpush.xpose.msra.mxu0 %v208
      %226 = vmatmul.f32.gmra.mxu0 %v205
      %v227 = vpop.f32.mrf.mxu0
      %v228 = vadd.f32 0.0, %v227
      %229 = vdwg.mxu0
      %v230 = vmul.f32 %v228, 0.25
      %vm231 = vcmask 64512
      %v232 = vsel %vm231, %v230, -inf
      %233 = vmax.xlane.f32.xlu0 %v232
      %v234 = vpop.xlane.xlu0 %233
      %v235 = vsub.f32 %v230, %v234
      %v236 = vmul.f32 %v235, 1.442695
      %v237 = vpow.pop %v236
      %v238 = vsel %vm231, %v237, 0.0
      %239 = vadd.xlane.f32.xlu0 %v238
      %v240 = vpop.xlane.xlu0 %239
      %v241 = vrcp.pop %v240
      %v242 = vmul.f32 %v240, %v241
      %v243 = vsub.f32 1.0, %v242
      %v244 = vmul.f32 %v241, %v243
      %v245 = vadd.f32 %v241, %v244
      %vm246 = vweird.f32 %v240
      %vm247 = vweird.f32 %v241
      %vm248 = vmor %vm246, %vm247
      %v249 = vsel %vm248, %v241, %v245
      %v250 = vand.u32 2147483647, %v240
      %vm251 = vcmp.eq.f32.partialorder %v250, 8.507059e+37
      %v252 = vand.u32 %v240, 2147483648
      %v253 = vor.u32 1.1754944e-38, %v252
      %v254 = vsel %vm251, %v253, %v249
      %v255 = vmul.f32 %v237, %v254
      %v257 = vsel %vm231, %v255, 0
      %259 = vmatpush.msra.mxu0 0.0
      %260 = vmatpush.msra.mxu0 0.0
      %261 = vmatpush.msra.mxu0 0.0
      %262 = vmatpush.msra.mxu0 0.0
      %263 = vmatpush.msra.mxu0 0.0
      %264 = vmatpush.msra.mxu0 0.0
      %265 = vmatpush.msra.mxu0 0.0
      %266 = vmatpush.msra.mxu0 0.0
      %267 = vmatpush.msra.mxu0 0.0
      %268 = vmatpush.msra.mxu0 0.0
      %269 = vmatpush.msra.mxu0 0.0
      %270 = vmatpush.msra.mxu0 0.0
      %271 = vmatpush.msra.mxu0 0.0
      %272 = vmatpush.msra.mxu0 0.0
      %273 = vmatpush.msra.mxu0 0.0
      %274 = vmatpush.msra.mxu0 %v202
      %275 = vmatmul.f32.gmra.mxu0 %v257
      %v276 = vpop.f32.mrf.mxu0
      %v277 = vadd.f32 0.0, %v276
      %278 = vdwg.mxu0
      %279 = vst.msk [vmem:[%s199] sm:$0xff] %vm203, %v277
      %p280 = scmp.lt.s32.totalorder %s14, 3
      %s281 = scalar_select %p280, %s14, 3
      %s282 = smul.addr %s281, 8
      %s283 = scalar_lea.vmem %s3, %s282
      // Predicated region
      $region33: #{qbert_attention.4} parent=31 // pred_check
        %p284 = pneg %p110
      $region34: #{qbert_attention.4} parent=31 // pred_check_branch
        %286 = sbr.rel (%p284) target = $region36
      $region35: #{qbert_attention.4} parent=31 // pred_region
        _
      $region36: #{qbert_attention.4} parent=31 // pred_fallthru
        _
    $region32: #{qbert_attention.4} parent=5 // pred_fallthru
      _
    %p287 = scmp.le.s32.totalorder 2, %s9
    // Predicated region
    $region37: #{qbert_attention.4} parent=5 // pred_check
      %p288 = pneg %p287
    $region38: #{qbert_attention.4} parent=5 // pred_check_branch
      %290 = sbr.rel (%p288) target = $region40
    $region39: #{qbert_attention.4} parent=5 // pred_region
      %s291 = ssub.s32 %s9, 2
      // Predicated region
      $region41: #{qbert_attention.4} parent=39 // pred_check
        %p292 = pneg %p116
      $region42: #{qbert_attention.4} parent=39 // pred_check_branch
        %294 = sbr.rel (%p292) target = $region44
      $region43: #{qbert_attention.4} parent=39 // pred_region
        %p295 = scmp.lt.s32.totalorder %s15, 3
        %s296 = scalar_select %p295, %s15, 3
        %s297 = smul.addr %s296, 8
        %s298 = scalar_lea.vmem %s3, %s297
      $region44: #{qbert_attention.4} parent=39 // pred_fallthru
        _
    $region40: #{qbert_attention.4} parent=5 // pred_fallthru
      _
  $region6: #{qbert_attention.4} parent=0 // loop_footer
    %s13 = sadd.s32 1, %s9
  $region7: #{qbert_attention.4} parent=0 // loop_footer_branch
    %8 = sbr.rel target = $region3
  $region8: #{qbert_attention.4} parent=0 // loop_exit
    _

// kernel: qbert_attention.5
$region0: #{qbert_attention.5}
  #allocation0 [shape = 'u32[]', space=smem, size = 0x4, offset = 0x4, fixed_abs, tag = 'smem constant byte address 0x4 - core index']
  #allocation1 [shape = 'u32[72,128]{1,0:T(1,128)}', space=vmem, size = 0x9000, scoped, tag = 'internal scratch']
  #allocation2 [shape = 'f32[1]{0:T(128)S(6)}', space=smem, size = 0x200, scoped, tag = 'scoped memory for qbert_attention.5']
  %s0 = inlined_call_operand.<no memory space> [shape: f32[1], index: 0, kind: input, shape index: {}]
  %s1 = inlined_call_operand.vmem [shape: f32[16,32], index: 1, kind: input, shape index: {}]
  %s2 = inlined_call_operand.vmem [shape: f32[32,32], index: 2, kind: input, shape index: {}]
  %s3 = inlined_call_operand.vmem [shape: f32[1,32], index: 3, kind: input, shape index: {}]
  %s4 = inlined_call_operand.vmem [shape: f32[16,32], index: 4, kind: input, shape index: {}]
  %s5 = inlined_call_operand.vmem [shape: f32[1,32], index: 5, kind: input, shape index: {}]
  %s6 = inlined_call_operand.vmem [shape: f32[1,32], index: 6, kind: input, shape index: {}]
  %s7 = inlined_call_operand.hbm [shape: f32[16,32], index: 7, kind: output, shape index: {}]
  %s8 = sld [smem:[#allocation0]]
  $region38: #{qbert_attention.5} parent=0
    _
  %s10 = ssub.s32 1, %s8
  %s11 = scalar_select 0, %s10, %s8
  %12 = sst [smem:[#allocation2]] %s0
  $region1: #{qbert_attention.5} parent=0
    #allocation3 [shape = 'u8[8192]{0}', space=vmem, size = 0x2000, scoped, tag = 'output window, operand 0, single buffered']
    #allocation4 [shape = 's32[1]{0}', space=sflag, size = 0x4, scoped, tag = 'scoped memory for qbert_attention.5']
    %13 = vsyncpa [#allocation4], 0
    // Predicated region
    $region2: #{qbert_attention.5} parent=1 // pred_check
      _
    $region3: #{qbert_attention.5} parent=1 // pred_check_branch
      %15 = sbr.rel (0) target = $region5
    $region4: #{qbert_attention.5} parent=1 // pred_region
      _
    $region5: #{qbert_attention.5} parent=1 // pred_fallthru
      _
    // Predicated region
    $region6: #{qbert_attention.5} parent=1 // pred_check
      _
    $region7: #{qbert_attention.5} parent=1 // pred_check_branch
      %17 = sbr.rel (0) target = $region9
    $region8: #{qbert_attention.5} parent=1 // pred_region
      _
    $region9: #{qbert_attention.5} parent=1 // pred_fallthru
      _
    // Predicated region
    $region10: #{qbert_attention.5} parent=1 // pred_check
      _
    $region11: #{qbert_attention.5} parent=1 // pred_check_branch
      %19 = sbr.rel (0) target = $region13
    $region12: #{qbert_attention.5} parent=1 // pred_region
      _
    $region13: #{qbert_attention.5} parent=1 // pred_fallthru
      _
    // Predicated region
    $region14: #{qbert_attention.5} parent=1 // pred_check
      _
    $region15: #{qbert_attention.5} parent=1 // pred_check_branch
      %21 = sbr.rel (0) target = $region17
    $region16: #{qbert_attention.5} parent=1 // pred_region
      _
    $region17: #{qbert_attention.5} parent=1 // pred_fallthru
      _
    // Predicated region
    $region18: #{qbert_attention.5} parent=1 // pred_check
      _
    $region19: #{qbert_attention.5} parent=1 // pred_check_branch
      %23 = sbr.rel (0) target = $region21
    $region20: #{qbert_attention.5} parent=1 // pred_region
      _
    $region21: #{qbert_attention.5} parent=1 // pred_fallthru
      _
    // Predicated region
    $region22: #{qbert_attention.5} parent=1 // pred_check
      _
    $region23: #{qbert_attention.5} parent=1 // pred_check_branch
      %25 = sbr.rel (0) target = $region25
    $region24: #{qbert_attention.5} parent=1 // pred_region
      _
    $region25: #{qbert_attention.5} parent=1 // pred_fallthru
      _
    // Predicated region
    $region26: #{qbert_attention.5} parent=1 // pred_check
      _
    $region27: #{qbert_attention.5} parent=1 // pred_check_branch
      %27 = sbr.rel (0) target = $region29
    $region28: #{qbert_attention.5} parent=1 // pred_region
      _
    $region29: #{qbert_attention.5} parent=1 // pred_fallthru
      _
    %v28 = vld [vmem:[%s1] sm:$0xff]
    %v29 = vld [vmem:[%s1 + $0x8] sm:$0xff]
    %v30 = vld [vmem:[%s2] sm:$0xff]
    %v31 = vld [vmem:[%s2 + $0x8] sm:$0xff]
    %v32 = vld [vmem:[%s2 + $0x10] sm:$0xff]
    %v33 = vld [vmem:[%s2 + $0x18] sm:$0xff]
    %v34 = vld [vmem:[%s3] sm:$0x1]
    %v36 = vperm.slane %v34, 0
    %vm38 = vcmask 261120
    %v40 = vsel %vm38, %v28, 0
    %v43 = vsel %vm38, %v29, 0
    %45 = vmatpush.msra.mxu0 0.0
    %46 = vmatpush.msra.mxu0 0.0
    %47 = vmatpush.msra.mxu0 0.0
    %48 = vmatpush.msra.mxu0 0.0
    %49 = vmatpush.msra.mxu0 0.0
    %50 = vmatpush.msra.mxu0 0.0
    %51 = vmatpush.msra.mxu0 0.0
    %52 = vmatpush.msra.mxu0 0.0
    %53 = vmatpush.msra.mxu0 0.0
    %54 = vmatpush.msra.mxu0 0.0
    %55 = vmatpush.msra.mxu0 0.0
    %56 = vmatpush.msra.mxu0 0.0
    %57 = vmatpush.msra.mxu0 %v33
    %58 = vmatpush.msra.mxu0 %v32
    %59 = vmatpush.msra.mxu0 %v31
    %60 = vmatpush.msra.mxu0 %v30
    %61 = vmatmul.f32.gmra.mxu0 %v40
    %v62 = vpop.f32.mrf.mxu0
    %v63 = vadd.f32 %v36, %v62
    %64 = vmatmul.f32.gmra.mxu0 %v43
    %v65 = vpop.f32.mrf.mxu0
    %v66 = vadd.f32 %v36, %v65
    %67 = vdwg.mxu0
    %v68 = vld [vmem:[%s4] sm:$0xff]
    %v69 = vld [vmem:[%s4 + $0x8] sm:$0xff]
    %v70 = vadd.f32 %v63, %v68
    %v71 = vadd.f32 %v66, %v69
    %v72 = vsel %vm38, %v70, 0.0
    %73 = vadd.xlane.f32.xlu0 %v72
    %v74 = vpop.xlane.xlu0 %73
    %v75 = vsel %vm38, %v71, 0.0
    %76 = vadd.xlane.f32.xlu0 %v75
    %v77 = vpop.xlane.xlu0 %76
    %v78 = vrcp.pop 32.0
    %v79 = vmul.f32 32.0, %v78
    %v80 = vsub.f32 1.0, %v79
    %v81 = vmul.f32 %v78, %v80
    %v82 = vadd.f32 %v78, %v81
    %vm83 = vweird.f32 %v78
    %v84 = vsel %vm83, %v78, %v82
    %v85 = vmul.f32 %v74, %v84
    %v86 = vmul.f32 %v77, %v84
    %v87 = vsub.f32 %v70, %v85
    %v88 = vsub.f32 %v71, %v86
    %v89 = vmul.f32 %v87, %v87
    %v90 = vmul.f32 %v88, %v88
    %v91 = vsel %vm38, %v89, 0.0
    %92 = vadd.xlane.f32.xlu0 %v91
    %v93 = vpop.xlane.xlu0 %92
    %v94 = vsel %vm38, %v90, 0.0
    %95 = vadd.xlane.f32.xlu0 %v94
    %v96 = vpop.xlane.xlu0 %95
    %v97 = vmul.f32 %v93, %v84
    %v98 = vmul.f32 %v96, %v84
    %v99 = vadd.f32 %v97, 1e-12
    %v100 = vadd.f32 %v98, 1e-12
    %v101 = vrsqrt.pop %v99
    %v102 = vmul.f32 %v101, %v99
    %v103 = vmul.f32 %v102, %v101
    %v104 = vmul.f32 0.5, %v103
    %v105 = vsub.f32 1.5, %v104
    %v106 = vmul.f32 %v101, %v105
    %vm107 = vweird.f32 %v99
    %vm108 = vweird.f32 %v101
    %vm109 = vmor %vm107, %vm108
    %v110 = vsel %vm109, %v101, %v106
    %v111 = vrsqrt.pop %v100
    %v112 = vmul.f32 %v111, %v100
    %v113 = vmul.f32 %v112, %v111
    %v114 = vmul.f32 0.5, %v113
    %v115 = vsub.f32 1.5, %v114
    %v116 = vmul.f32 %v111, %v115
    %vm117 = vweird.f32 %v100
    %vm118 = vweird.f32 %v111
    %vm119 = vmor %vm117, %vm118
    %v120 = vsel %vm119, %v111, %v116
    %v121 = vmul.f32 %v87, %v110
    %v122 = vmul.f32 %v88, %v120
    %v123 = vld [vmem:[%s5] sm:$0x1]
    %v125 = vperm.slane %v123, 0
    %v127 = vmul.f32 %v121, %v125
    %v128 = vmul.f32 %v122, %v125
    %v129 = vld [vmem:[%s6] sm:$0x1]
    %v131 = vperm.slane %v129, 0
    %v133 = vadd.f32 %v127, %v131
    %v134 = vadd.f32 %v128, %v131
    %135 = vst.msk [vmem:[#allocation3] sm:$0xff] %vm38, %v133
    %136 = vst.msk [vmem:[#allocation3 + $0x8] sm:$0xff] %vm38, %v134
    // Predicated region
    $region30: #{qbert_attention.5} parent=1 // pred_check
      _
    $region31: #{qbert_attention.5} parent=1 // pred_check_branch
      %138 = sbr.rel (0) target = $region33
    $region32: #{qbert_attention.5} parent=1 // pred_region
      %140 = vsyncadd [#allocation4], 0
      %s141 = sshll.u32 [#allocation3], 4
      %s142 = int_to_ptr.vmem [resolvable:$true] %s141
      %s143 = sshll.u32 %s7, 4
      %s144 = int_to_ptr.hbm [resolvable:$true] %s143
      %149 = dma.vmem_to_hbm [thread:$0]  %s142, 256, %s144, [#allocation4], 128, 128, 8
    $region33: #{qbert_attention.5} parent=1 // pred_fallthru
      _
    // Predicated region
    $region34: #{qbert_attention.5} parent=1 // pred_check
      _
    $region35: #{qbert_attention.5} parent=1 // pred_check_branch
      %151 = sbr.rel (0) target = $region37
    $region36: #{qbert_attention.5} parent=1 // pred_region
      %153 = dma.done [#allocation4], 256
    $region37: #{qbert_attention.5} parent=1 // pred_fallthru
      _
    %154 = vsyncpa [#allocation4], 1

</llo_original>
